<compile_context>
chip_gen: v7x
topology: tpu7x:2x2x1
jax: 0.10.0
libtpu: 0.0.40
codegen_flags: <defaults>
</compile_context>

<pallas_src>
import jax
import jax.numpy as jnp
from jax.experimental import pallas as pl
from jax.experimental.pallas import tpu as pltpu


def _round_up(n: int, m: int) -> int:
    return ((n + m - 1) // m) * m


def _gru_cell_kernel(x_ref, h_ref, w_x3_ref, b3_ref, w_h2_ref, w_hrh_ref, out_ref):
    Hp = out_ref.shape[-1]          # lane-padded hidden size (multiple of 128)
    wdt = w_x3_ref.dtype            # weight storage dtype (bf16 or f32)

    h = h_ref[...]                  # f32, (tb, Hp)
    x = x_ref[...].astype(wdt)
    hb = h.astype(wdt)

    # x-side gate pre-activations, one lane-dense slab (tb, 3*Hp):
    #   cols [0:Hp) -> z | [Hp:2Hp) -> r | [2Hp:3Hp) -> candidate.
    # All slice points below fall on 128-lane boundaries, so splits are free.
    gx = jnp.dot(x, w_x3_ref[...], preferred_element_type=jnp.float32) + b3_ref[...]

    # h-side z/r pre-activations in one matmul: (tb, 2*Hp)
    gh = jnp.dot(hb, w_h2_ref[...], preferred_element_type=jnp.float32)

    zr = jax.nn.sigmoid(gx[:, : 2 * Hp] + gh)
    z_t = zr[:, :Hp]
    r_t = zr[:, Hp:]

    # candidate = tanh(x Wxh + b + (r*h) Whrh); r*h computed in f32, cast for MXU.
    c_pre = gx[:, 2 * Hp :] + jnp.dot(
        (r_t * h).astype(wdt), w_hrh_ref[...], preferred_element_type=jnp.float32
    )
    cand = jnp.tanh(c_pre)

    # h_t = z*h + (1-z)*cand  ==  cand + z*(h - cand)   (one fewer multiply)
    out_ref[...] = (cand + z_t * (h - cand)).astype(out_ref.dtype)


def pack_gru_params(params, *, weights_dtype=jnp.bfloat16):
    """One-time parameter prep: fuse per-gate weights/biases into packed,
    lane-padded kernel operands.  Call once and reuse across invocations so
    the full-weight HBM round trip is not paid per step.

    Returns a dict with:
      w_x3  (In, 3*Hp)  [Wxz | Wxr | Wxh]            (weights_dtype)
      w_h2  (Hp, 2*Hp)  [Whz | Whr]                  (weights_dtype)
      w_hrh (Hp, Hp)    Whrh                         (weights_dtype)
      b3    (1, 3*Hp)   fused biases                 (float32)
    where Hp = round_up(H, 128) and each gate block is zero-padded to Hp lanes.
    """
    In, H = params["w_xz"].shape
    Hp = _round_up(H, 128)

    def pad_cols(a):   # (..., H) -> (..., Hp)
        return jnp.pad(a, ((0, 0), (0, Hp - H)))

    def pad_rows(a):   # (H, ...) -> (Hp, ...)
        return jnp.pad(a, ((0, Hp - H), (0, 0)))

    w_x3 = jnp.concatenate(
        [pad_cols(params["w_xz"]), pad_cols(params["w_xr"]), pad_cols(params["w_xh"])],
        axis=1,
    )
    w_h2 = jnp.concatenate(
        [pad_rows(pad_cols(params["w_hz"])), pad_rows(pad_cols(params["w_hr"]))],
        axis=1,
    )
    w_hrh = pad_rows(pad_cols(params["w_hrh"]))
    # All six biases fold into one (1, 3*Hp) vector (plain adds after matmuls).
    b3 = jnp.concatenate(
        [
            pad_cols(params["b_xz"] + params["b_hz"]),
            pad_cols(params["b_xr"] + params["b_hr"]),
            pad_cols(params["b_xh"] + params["b_hrh"]),
        ],
        axis=1,
    )

    return {
        "w_x3": w_x3.astype(weights_dtype),
        "w_h2": w_h2.astype(weights_dtype),
        "w_hrh": w_hrh.astype(weights_dtype),
        "b3": b3.astype(jnp.float32),   # bias stays f32 (added to f32 accumulator)
        "input_size": In,
        "hidden_size": H,
        "hidden_padded": Hp,
    }


def gru_cell_pallas(x_t, h_t_1, packed):
    """Run the GRU cell forward pass in one Pallas kernel invocation.

    x_t:    (B, input_size)  float32
    h_t_1:  (B, hidden_size) float32
    packed: output of pack_gru_params (pre-fused, lane-padded weights).
    """
    B, In = x_t.shape
    H = packed["hidden_size"]
    Hp = packed["hidden_padded"]
    assert In == packed["input_size"]
    assert h_t_1.shape == (B, H)

    # Pad h to the lane-aligned hidden size.  Pad columns are inert: the
    # corresponding weight rows/cols and bias entries are zero, and the padded
    # output columns are sliced off below.
    h_pad = h_t_1 if Hp == H else jnp.pad(h_t_1, ((0, 0), (0, Hp - H)))

    # Batch tile: largest of 256/128/... that divides B (256 fills the
    # 256-wide MXU M dim on v6e/v7x); whole batch for tiny/odd B.
    tb = B
    for cand_tb in (256, 128, 64, 32, 16, 8):
        if B % cand_tb == 0:
            tb = cand_tb
            break
    num_tiles = B // tb

    # Grid-invariant weights: constant index map + single buffer.  Halves the
    # resident-weight VMEM footprint (the binding constraint on v7x's 64 MiB).
    def weight_spec(shape):
        return pl.BlockSpec(shape, lambda b: (0, 0), pipeline_mode=pl.Buffered(1))

    in_specs = [
        pl.BlockSpec((tb, In), lambda b: (b, 0)),      # x_t        (pipelined)
        pl.BlockSpec((tb, Hp), lambda b: (b, 0)),      # h_{t-1}    (pipelined)
        weight_spec((In, 3 * Hp)),                     # fused x-weights (resident)
        pl.BlockSpec((1, 3 * Hp), lambda b: (0, 0)),   # fused bias (tiny)
        weight_spec((Hp, 2 * Hp)),                     # fused h z/r weights
        weight_spec((Hp, Hp)),                         # W_hrh
    ]
    out_spec = pl.BlockSpec((tb, Hp), lambda b: (b, 0))

    # Only shard the batch across TensorCores when it is large enough to be
    # MXU-bound per core; small/single-tile batches are weight-DMA-bound and
    # megacore sharding would just duplicate weight HBM traffic.
    parallel = num_tiles >= 2 and B >= 256
    semantics = ("parallel",) if parallel else ("arbitrary",)

    out = pl.pallas_call(
        _gru_cell_kernel,
        out_shape=jax.ShapeDtypeStruct((B, Hp), jnp.float32),
        grid=(num_tiles,),
        in_specs=in_specs,
        out_specs=out_spec,
        compiler_params=pltpu.CompilerParams(
            dimension_semantics=semantics,
            # Above every generation's scoped default (16/32/32 MiB on
            # v5e/v6e/v7x) while leaving headroom under v7x's 64 MiB physical.
            vmem_limit_bytes=48 * 1024 * 1024,
        ),
    )(x_t, h_pad, packed["w_x3"], packed["b3"], packed["w_h2"], packed["w_hrh"])

    return out if Hp == H else out[:, :H]

    # TODO(synk): for recurrent use over a sequence, lift the time loop into a
    # single pallas_call (grid=(T, B//tb), time axis "arbitrary", weights on
    # constant index maps, h carried in VMEM scratch / input_output_aliases)
    # so the weights are DMA'd once per sequence instead of once per step.


def init_gru_params(key, input_size, hidden_size):
    """Deterministic parameter init mirroring torch.nn.Linear's shapes.

    torch.nn.Linear(in, out) stores weight (out, in); we store the transpose
    (in, out) so the kernel does x @ W.  Biases are kept as (1, out).
    """
    keys = jax.random.split(key, 12)

    def linear(kw, kb, fan_in, fan_out):
        bound = 1.0 / jnp.sqrt(fan_in)
        w = jax.random.uniform(kw, (fan_in, fan_out), jnp.float32, -bound, bound)
        b = jax.random.uniform(kb, (1, fan_out), jnp.float32, -bound, bound)
        return w, b

    p = {}
    p["w_xr"], p["b_xr"] = linear(keys[0], keys[1], input_size, hidden_size)
    p["w_xz"], p["b_xz"] = linear(keys[2], keys[3], input_size, hidden_size)
    p["w_xh"], p["b_xh"] = linear(keys[4], keys[5], input_size, hidden_size)
    p["w_hr"], p["b_hr"] = linear(keys[6], keys[7], hidden_size, hidden_size)
    p["w_hz"], p["b_hz"] = linear(keys[8], keys[9], hidden_size, hidden_size)
    p["w_hrh"], p["b_hrh"] = linear(keys[10], keys[11], hidden_size, hidden_size)
    return p


def gru_cell_reference(x_t, h_t_1, p):
    """Plain-JAX reference matching the PyTorch module forward exactly."""
    z_t = jax.nn.sigmoid(x_t @ p["w_xz"] + p["b_xz"] + h_t_1 @ p["w_hz"] + p["b_hz"])
    r_t = jax.nn.sigmoid(x_t @ p["w_xr"] + p["b_xr"] + h_t_1 @ p["w_hr"] + p["b_hr"])
    cand = jnp.tanh(x_t @ p["w_xh"] + p["b_xh"] + (r_t * h_t_1) @ p["w_hrh"] + p["b_hrh"])
    return z_t * h_t_1 + (1.0 - z_t) * cand


if __name__ == "__main__":
    batch = 8
    input_size = 16
    hidden_size = 32

    key = jax.random.PRNGKey(0)
    k_x, k_h, k_p = jax.random.split(key, 3)

    x_t = jax.random.normal(k_x, (batch, input_size), jnp.float32)
    h_t_1 = jax.random.normal(k_h, (batch, hidden_size), jnp.float32)
    params = init_gru_params(k_p, input_size, hidden_size)

    h_ref = gru_cell_reference(x_t, h_t_1, params)

    # --- f32-weight path: bit-for-bit check of the fusion/padding logic. ----
    packed_f32 = pack_gru_params(params, weights_dtype=jnp.float32)
    h_f32 = jax.block_until_ready(gru_cell_pallas(x_t, h_t_1, packed_f32))
    assert h_f32.shape == (batch, hidden_size)
    assert jnp.allclose(h_f32, h_ref, atol=1e-5, rtol=1e-5), (
        float(jnp.max(jnp.abs(h_f32 - h_ref)))
    )

    # --- bf16-weight path (default perf config): looser tolerance. ---------
    packed_bf16 = pack_gru_params(params)  # weights_dtype=bfloat16
    h_bf16 = jax.block_until_ready(gru_cell_pallas(x_t, h_t_1, packed_bf16))
    assert h_bf16.shape == (batch, hidden_size)
    assert jnp.allclose(h_bf16, h_ref, atol=5e-2, rtol=5e-2), (
        float(jnp.max(jnp.abs(h_bf16 - h_ref)))
    )

    print("KERNEL_OK")
</pallas_src>

<mosaic_0001>
module attributes {stable_mosaic.version = 11 : i64} {
  func.func @_gru_cell_kernel(%arg0: i32, %arg1: memref<8x16xf32, #tpu.memory_space<vmem>>, %arg2: memref<8x128xf32, #tpu.memory_space<vmem>>, %arg3: memref<16x384xf32, #tpu.memory_space<vmem>>, %arg4: memref<1x384xf32, #tpu.memory_space<vmem>>, %arg5: memref<128x256xf32, #tpu.memory_space<vmem>>, %arg6: memref<128x128xf32, #tpu.memory_space<vmem>>, %arg7: memref<8x128xf32, #tpu.memory_space<vmem>>) attributes {dimension_semantics = [#tpu.dimension_semantics<arbitrary>], iteration_bounds = array<i64: 1>, scalar_prefetch = 0 : i64, scratch_operands = 0 : i64, tpu.core_type = #tpu.core_type<tc>, window_params = [{transform_indices = @transform_0, window_bounds = array<i64: 8, 16>}, {transform_indices = @transform_1, window_bounds = array<i64: 8, 128>}, {pipeline_mode = #tpu.pipeline_mode<synchronous>, transform_indices = @transform_2, window_bounds = array<i64: 16, 384>}, {pipeline_mode = #tpu.pipeline_mode<synchronous>, transform_indices = @transform_3, window_bounds = array<i64: 1, 384>}, {pipeline_mode = #tpu.pipeline_mode<synchronous>, transform_indices = @transform_4, window_bounds = array<i64: 128, 256>}, {pipeline_mode = #tpu.pipeline_mode<synchronous>, transform_indices = @transform_5, window_bounds = array<i64: 128, 128>}, {transform_indices = @transform_6, window_bounds = array<i64: 8, 128>}]} {
    %c0 = arith.constant 0 : index
    %c0_0 = arith.constant 0 : index
    %0 = vector.load %arg2[%c0, %c0_0] : memref<8x128xf32, #tpu.memory_space<vmem>>, vector<8x128xf32>
    %c0_1 = arith.constant 0 : index
    %c0_2 = arith.constant 0 : index
    %1 = vector.load %arg1[%c0_1, %c0_2] : memref<8x16xf32, #tpu.memory_space<vmem>>, vector<8x16xf32>
    %c0_3 = arith.constant 0 : index
    %c0_4 = arith.constant 0 : index
    %2 = vector.load %arg3[%c0_3, %c0_4] : memref<16x384xf32, #tpu.memory_space<vmem>>, vector<16x384xf32>
    %cst = arith.constant dense<0.000000e+00> : vector<8x384xf32>
    %3 = tpu.matmul %1, %2, %cst {dimension_numbers = #tpu.dot_dimension_numbers<[1], [0], [0], [1], [0, 0, 1, 1], [], []>} : vector<8x16xf32>, vector<16x384xf32>, vector<8x384xf32> -> vector<8x384xf32>
    %c0_5 = arith.constant 0 : index
    %c0_6 = arith.constant 0 : index
    %4 = vector.load %arg4[%c0_5, %c0_6] : memref<1x384xf32, #tpu.memory_space<vmem>>, vector<1x384xf32>
    %5 = vector.broadcast %4 : vector<1x384xf32> to vector<8x384xf32>
    %6 = arith.addf %3, %5 : vector<8x384xf32>
    %c0_7 = arith.constant 0 : index
    %c0_8 = arith.constant 0 : index
    %7 = vector.load %arg5[%c0_7, %c0_8] : memref<128x256xf32, #tpu.memory_space<vmem>>, vector<128x256xf32>
    %cst_9 = arith.constant dense<0.000000e+00> : vector<8x256xf32>
    %8 = tpu.matmul %0, %7, %cst_9 {dimension_numbers = #tpu.dot_dimension_numbers<[1], [0], [0], [1], [0, 0, 1, 1], [], []>} : vector<8x128xf32>, vector<128x256xf32>, vector<8x256xf32> -> vector<8x256xf32>
    %9 = vector.extract_strided_slice %6 {offsets = [0, 0], sizes = [8, 256], strides = [1, 1]} : vector<8x384xf32> to vector<8x256xf32>
    %10 = arith.addf %9, %8 : vector<8x256xf32>
    %11 = arith.negf %10 : vector<8x256xf32>
    %12 = math.exp %11 : vector<8x256xf32>
    %cst_10 = arith.constant 1.000000e+00 : f32
    %13 = vector.broadcast %cst_10 : f32 to vector<8x256xf32>
    %14 = arith.addf %13, %12 : vector<8x256xf32>
    %15 = arith.divf %13, %14 : vector<8x256xf32>
    %16 = vector.extract_strided_slice %15 {offsets = [0, 0], sizes = [8, 128], strides = [1, 1]} : vector<8x256xf32> to vector<8x128xf32>
    %17 = vector.extract_strided_slice %15 {offsets = [0, 128], sizes = [8, 128], strides = [1, 1]} : vector<8x256xf32> to vector<8x128xf32>
    %18 = vector.extract_strided_slice %6 {offsets = [0, 256], sizes = [8, 128], strides = [1, 1]} : vector<8x384xf32> to vector<8x128xf32>
    %19 = arith.mulf %17, %0 : vector<8x128xf32>
    %c0_11 = arith.constant 0 : index
    %c0_12 = arith.constant 0 : index
    %20 = vector.load %arg6[%c0_11, %c0_12] : memref<128x128xf32, #tpu.memory_space<vmem>>, vector<128x128xf32>
    %cst_13 = arith.constant dense<0.000000e+00> : vector<8x128xf32>
    %21 = tpu.matmul %19, %20, %cst_13 {dimension_numbers = #tpu.dot_dimension_numbers<[1], [0], [0], [1], [0, 0, 1, 1], [], []>} : vector<8x128xf32>, vector<128x128xf32>, vector<8x128xf32> -> vector<8x128xf32>
    %22 = arith.addf %18, %21 : vector<8x128xf32>
    %23 = math.tanh %22 : vector<8x128xf32>
    %24 = arith.subf %0, %23 : vector<8x128xf32>
    %25 = arith.mulf %16, %24 : vector<8x128xf32>
    %26 = arith.addf %23, %25 : vector<8x128xf32>
    %c0_14 = arith.constant 0 : index
    %c0_15 = arith.constant 0 : index
    %27 = vector.load %arg7[%c0_14, %c0_15] : memref<8x128xf32, #tpu.memory_space<vmem>>, vector<8x128xf32>
    tpu.vector_store %arg7[%c0_14, %c0_15], %26 {strides = array<i32>} : memref<8x128xf32, #tpu.memory_space<vmem>>, vector<8x128xf32>,
    return
  }
  func.func @transform_0(%arg0: i32) -> (i32, i32) {
    %c0_i32 = arith.constant 0 : i32
    %c0_i32_0 = arith.constant 0 : i32
    return %arg0, %c0_i32 : i32, i32
  }
  func.func @transform_1(%arg0: i32) -> (i32, i32) {
    %c0_i32 = arith.constant 0 : i32
    %c0_i32_0 = arith.constant 0 : i32
    return %arg0, %c0_i32 : i32, i32
  }
  func.func @transform_2(%arg0: i32) -> (i32, i32) {
    %c0_i32 = arith.constant 0 : i32
    %c0_i32_0 = arith.constant 0 : i32
    %c0_i32_1 = arith.constant 0 : i32
    return %c0_i32, %c0_i32_0 : i32, i32
  }
  func.func @transform_3(%arg0: i32) -> (i32, i32) {
    %c0_i32 = arith.constant 0 : i32
    %c0_i32_0 = arith.constant 0 : i32
    %c0_i32_1 = arith.constant 0 : i32
    return %c0_i32, %c0_i32_0 : i32, i32
  }
  func.func @transform_4(%arg0: i32) -> (i32, i32) {
    %c0_i32 = arith.constant 0 : i32
    %c0_i32_0 = arith.constant 0 : i32
    %c0_i32_1 = arith.constant 0 : i32
    return %c0_i32, %c0_i32_0 : i32, i32
  }
  func.func @transform_5(%arg0: i32) -> (i32, i32) {
    %c0_i32 = arith.constant 0 : i32
    %c0_i32_0 = arith.constant 0 : i32
    %c0_i32_1 = arith.constant 0 : i32
    return %c0_i32, %c0_i32_0 : i32, i32
  }
  func.func @transform_6(%arg0: i32) -> (i32, i32) {
    %c0_i32 = arith.constant 0 : i32
    %c0_i32_0 = arith.constant 0 : i32
    return %arg0, %c0_i32 : i32, i32
  }
}

</mosaic_0001>

<llo_original>
// kernel: tpu_custom_call.1
$region0: #{tpu_custom_call.1}
  #allocation0 [shape = 'u32[]', space=smem, size = 0x4, offset = 0x4, fixed_abs, tag = 'smem constant byte address 0x4 - core index']
  #allocation1 [shape = 'u32[144,128]{1,0:T(1,128)}', space=vmem, size = 0x12000, scoped, tag = 'internal scratch']
  %s0 = inlined_call_operand.hbm [shape: f32[8,16], index: 0, kind: input, shape index: {}]
  %s1 = inlined_call_operand.hbm [shape: f32[8,128], index: 1, kind: input, shape index: {}]
  %s2 = inlined_call_operand.hbm [shape: f32[16,384], index: 2, kind: input, shape index: {}]
  %s3 = inlined_call_operand.vmem [shape: f32[1,384], index: 3, kind: input, shape index: {}]
  %s4 = inlined_call_operand.hbm [shape: f32[128,256], index: 4, kind: input, shape index: {}]
  %s5 = inlined_call_operand.hbm [shape: f32[128,128], index: 5, kind: input, shape index: {}]
  %s6 = inlined_call_operand.hbm [shape: f32[8,128], index: 6, kind: output, shape index: {}]
  %s7 = sld [smem:[#allocation0]]
  $region54: #{tpu_custom_call.1} parent=0
    _
  %s9 = ssub.s32 1, %s7
  %s10 = scalar_select 0, %s9, %s7
  $region1: #{tpu_custom_call.1} parent=0
    #allocation2 [shape = 'u8[4096]{0}', space=vmem, size = 0x1000, scoped, tag = 'input window, operand 0, single buffered']
    #allocation3 [shape = 's32[1]{0}', space=sflag, size = 0x4, scoped, tag = 'scoped memory for tpu_custom_call.1']
    #allocation4 [shape = 's32[1]{0}', space=sflag, size = 0x4, scoped, tag = 'scoped memory for tpu_custom_call.1']
    #allocation5 [shape = 'u8[4096]{0}', space=vmem, size = 0x1000, scoped, tag = 'input window, operand 1, single buffered']
    #allocation6 [shape = 's32[1]{0}', space=sflag, size = 0x4, scoped, tag = 'scoped memory for tpu_custom_call.1']
    #allocation7 [shape = 'u8[24576]{0}', space=vmem, size = 0x6000, scoped, tag = 'input window, operand 2, single buffered']
    #allocation8 [shape = 'u8[131072]{0}', space=vmem, size = 0x20000, scoped, tag = 'input window, operand 4, single buffered']
    #allocation9 [shape = 's32[1]{0}', space=sflag, size = 0x4, scoped, tag = 'scoped memory for tpu_custom_call.1']
    #allocation10 [shape = 'u8[65536]{0}', space=vmem, size = 0x10000, scoped, tag = 'input window, operand 5, single buffered']
    #allocation11 [shape = 'u8[4096]{0}', space=vmem, size = 0x1000, scoped, tag = 'output window, operand 0, single buffered']
    %11 = vsyncpa [#allocation3], 0
    %12 = vsyncpa [#allocation6], 0
    %13 = vsyncpa [#allocation9], 0
    %14 = vsyncpa [#allocation4], 0
    // Predicated region
    $region2: #{tpu_custom_call.1} parent=1 // pred_check
      _
    $region3: #{tpu_custom_call.1} parent=1 // pred_check_branch
      %16 = sbr.rel (0) target = $region5
    $region4: #{tpu_custom_call.1} parent=1 // pred_region
      %s18 = ssub.s32 128, 128
      %19 = vsyncadd [#allocation3], %s18
      %s21 = sshll.u32 [#allocation2], 4
      %s22 = int_to_ptr.vmem [resolvable:$true] %s21
      %24 = dma.hbm_to_vmem [thread:$0]  %s0, 128, %s22, [#allocation3]
    $region5: #{tpu_custom_call.1} parent=1 // pred_fallthru
      _
    // Predicated region
    $region6: #{tpu_custom_call.1} parent=1 // pred_check
      _
    $region7: #{tpu_custom_call.1} parent=1 // pred_check_branch
      %26 = sbr.rel (0) target = $region9
    $region8: #{tpu_custom_call.1} parent=1 // pred_region
      %s28 = ssub.s32 128, 128
      %29 = vsyncadd [#allocation6], %s28
      %s31 = sshll.u32 [#allocation5], 4
      %s32 = int_to_ptr.vmem [resolvable:$true] %s31
      %34 = dma.hbm_to_vmem [thread:$0]  %s1, 128, %s32, [#allocation6]
    $region9: #{tpu_custom_call.1} parent=1 // pred_fallthru
      _
    // Predicated region
    $region10: #{tpu_custom_call.1} parent=1 // pred_check
      _
    $region11: #{tpu_custom_call.1} parent=1 // pred_check_branch
      %36 = sbr.rel (0) target = $region13
    $region12: #{tpu_custom_call.1} parent=1 // pred_region
      %s38 = ssub.s32 768, 768
      %39 = vsyncadd [#allocation6], %s38
      %s40 = sshll.u32 [#allocation7], 4
      %s41 = int_to_ptr.vmem [resolvable:$true] %s40
      %46 = dma.hbm_to_vmem [thread:$0]  %s2, 768, %s41, [#allocation6], 384, 384, 24
    $region13: #{tpu_custom_call.1} parent=1 // pred_fallthru
      _
    // Predicated region
    $region14: #{tpu_custom_call.1} parent=1 // pred_check
      _
    $region15: #{tpu_custom_call.1} parent=1 // pred_check_branch
      %48 = sbr.rel (0) target = $region17
    $region16: #{tpu_custom_call.1} parent=1 // pred_region
      _
    $region17: #{tpu_custom_call.1} parent=1 // pred_fallthru
      _
    // Predicated region
    $region18: #{tpu_custom_call.1} parent=1 // pred_check
      _
    $region19: #{tpu_custom_call.1} parent=1 // pred_check_branch
      %50 = sbr.rel (0) target = $region21
    $region20: #{tpu_custom_call.1} parent=1 // pred_region
      %s52 = ssub.s32 4096, 4096
      %53 = vsyncadd [#allocation9], %s52
      %s54 = sshll.u32 [#allocation8], 4
      %s55 = int_to_ptr.vmem [resolvable:$true] %s54
      %60 = dma.hbm_to_vmem [thread:$0]  %s4, 4096, %s55, [#allocation9], 256, 256, 16
    $region21: #{tpu_custom_call.1} parent=1 // pred_fallthru
      _
    // Predicated region
    $region22: #{tpu_custom_call.1} parent=1 // pred_check
      _
    $region23: #{tpu_custom_call.1} parent=1 // pred_check_branch
      %62 = sbr.rel (0) target = $region25
    $region24: #{tpu_custom_call.1} parent=1 // pred_region
      %s64 = ssub.s32 2048, 2048
      %65 = vsyncadd [#allocation9], %s64
      %s66 = sshll.u32 [#allocation10], 4
      %s67 = int_to_ptr.vmem [resolvable:$true] %s66
      %72 = dma.hbm_to_vmem [thread:$0]  %s5, 2048, %s67, [#allocation9], 128, 128, 8
    $region25: #{tpu_custom_call.1} parent=1 // pred_fallthru
      _
    // Predicated region
    $region26: #{tpu_custom_call.1} parent=1 // pred_check
      _
    $region27: #{tpu_custom_call.1} parent=1 // pred_check_branch
      %74 = sbr.rel (0) target = $region29
    $region28: #{tpu_custom_call.1} parent=1 // pred_region
      %75 = dma.done [#allocation3], 128
    $region29: #{tpu_custom_call.1} parent=1 // pred_fallthru
      _
    // Predicated region
    $region30: #{tpu_custom_call.1} parent=1 // pred_check
      _
    $region31: #{tpu_custom_call.1} parent=1 // pred_check_branch
      %77 = sbr.rel (0) target = $region33
    $region32: #{tpu_custom_call.1} parent=1 // pred_region
      %78 = dma.done [#allocation6], 128
    $region33: #{tpu_custom_call.1} parent=1 // pred_fallthru
      _
    // Predicated region
    $region34: #{tpu_custom_call.1} parent=1 // pred_check
      _
    $region35: #{tpu_custom_call.1} parent=1 // pred_check_branch
      %80 = sbr.rel (0) target = $region37
    $region36: #{tpu_custom_call.1} parent=1 // pred_region
      %81 = dma.done [#allocation6], 768
    $region37: #{tpu_custom_call.1} parent=1 // pred_fallthru
      _
    // Predicated region
    $region38: #{tpu_custom_call.1} parent=1 // pred_check
      _
    $region39: #{tpu_custom_call.1} parent=1 // pred_check_branch
      %83 = sbr.rel (0) target = $region41
    $region40: #{tpu_custom_call.1} parent=1 // pred_region
      %84 = dma.done [#allocation9], 4096
    $region41: #{tpu_custom_call.1} parent=1 // pred_fallthru
      _
    // Predicated region
    $region42: #{tpu_custom_call.1} parent=1 // pred_check
      _
    $region43: #{tpu_custom_call.1} parent=1 // pred_check_branch
      %86 = sbr.rel (0) target = $region45
    $region44: #{tpu_custom_call.1} parent=1 // pred_region
      %87 = dma.done [#allocation9], 2048
    $region45: #{tpu_custom_call.1} parent=1 // pred_fallthru
      _
    %v88 = vld [vmem:[#allocation5] sm:$0xff]
    %v89 = vld [vmem:[#allocation2] sm:$0xff]
    %v90 = vld [vmem:[#allocation7] sm:$0xff]
    %v91 = vld [vmem:[#allocation7 + $0x8] sm:$0xff]
    %v92 = vld [vmem:[#allocation7 + $0x10] sm:$0xff]
    %v93 = vld [vmem:[#allocation7 + $0x18] sm:$0xff]
    %v94 = vld [vmem:[#allocation7 + $0x20] sm:$0xff]
    %v95 = vld [vmem:[#allocation7 + $0x28] sm:$0xff]
    %v96 = vld [vmem:[%s3] sm:$0x7]
    %v98 = vlaneseq
    %v99 = vshrl.u32 %v98, 7
    %v100 = vsub.s32 0, %v99
    %v101 = vrot.slane %v96, %v100
    %v102 = vlaneseq
    %v103 = vshrl.u32 %v102, 7
    %v104 = vsub.s32 1, %v103
    %v105 = vrot.slane %v96, %v104
    %v106 = vlaneseq
    %v107 = vshrl.u32 %v106, 7
    %v108 = vsub.s32 2, %v107
    %v109 = vrot.slane %v96, %v108
    %vm113 = vcmask 130048
    %v115 = vsel %vm113, %v89, 0
    %117 = vmatprep.subr.mxu0 %v91
    %118 = vmatpush1.msra.mxu0 %v90
    %119 = vmatprep.subr.mxu0 %v94
    %120 = vmatpush1.msra.mxu0 %v93
    %121 = vmatprep.subr.mxu0 0.0
    %122 = vmatpush1.msra.mxu0 0.0
    %123 = vmatprep.subr.mxu0 0.0
    %124 = vmatpush1.msra.mxu0 0.0
    %125 = vmatprep.subr.mxu0 0.0
    %126 = vmatpush1.msra.mxu0 0.0
    %127 = vmatprep.subr.mxu0 0.0
    %128 = vmatpush1.msra.mxu0 0.0
    %129 = vmatprep.subr.mxu0 0.0
    %130 = vmatpush1.msra.mxu0 0.0
    %131 = vmatprep.subr.mxu0 0.0
    %132 = vmatpush1.msra.mxu0 0.0
    %133 = vmatprep.subr.mxu0 0.0
    %134 = vmatpush1.msra.mxu0 0.0
    %135 = vmatprep.subr.mxu0 0.0
    %136 = vmatpush1.msra.mxu0 0.0
    %137 = vmatprep.subr.mxu0 0.0
    %138 = vmatpush1.msra.mxu0 0.0
    %139 = vmatprep.subr.mxu0 0.0
    %140 = vmatpush1.msra.mxu0 0.0
    %141 = vmatprep.subr.mxu0 0.0
    %142 = vmatpush1.msra.mxu0 0.0
    %143 = vmatprep.subr.mxu0 0.0
    %144 = vmatpush1.msra.mxu0 0.0
    %145 = vmatprep.subr.mxu0 0.0
    %146 = vmatpush1.msra.mxu0 0.0
    %147 = vmatprep.subr.mxu0 0.0
    %148 = vmatpush1.msra.mxu0 0.0
    %149 = vmatprep.subr.mxu0 0.0
    %150 = vmatpush1.msra.mxu0 0.0
    %151 = vmatprep.subr.mxu0 0.0
    %152 = vmatpush1.msra.mxu0 0.0
    %153 = vmatprep.subr.mxu0 0.0
    %154 = vmatpush1.msra.mxu0 0.0
    %155 = vmatprep.subr.mxu0 0.0
    %156 = vmatpush1.msra.mxu0 0.0
    %157 = vmatprep.subr.mxu0 0.0
    %158 = vmatpush1.msra.mxu0 0.0
    %159 = vmatprep.subr.mxu0 0.0
    %160 = vmatpush1.msra.mxu0 0.0
    %161 = vmatprep.subr.mxu0 0.0
    %162 = vmatpush1.msra.mxu0 0.0
    %163 = vmatprep.subr.mxu0 0.0
    %164 = vmatpush1.msra.mxu0 0.0
    %165 = vmatprep.subr.mxu0 0.0
    %166 = vmatpush1.msra.mxu0 0.0
    %167 = vmatprep.subr.mxu0 0.0
    %168 = vmatpush1.msra.mxu0 0.0
    %169 = vmatprep.subr.mxu0 0.0
    %170 = vmatpush1.msra.mxu0 0.0
    %171 = vmatprep.subr.mxu0 0.0
    %172 = vmatpush1.msra.mxu0 0.0
    %173 = vmatprep.subr.mxu0 0.0
    %174 = vmatpush1.msra.mxu0 0.0
    %175 = vmatprep.subr.mxu0 0.0
    %176 = vmatpush1.msra.mxu0 0.0
    %177 = vmatprep.subr.mxu0 0.0
    %178 = vmatpush1.msra.mxu0 0.0
    %179 = vmatprep.subr.mxu0 0.0
    %180 = vmatpush1.msra.mxu0 0.0
    %181 = vmatprep.mubr.f32.mxu0 0.0
    %182 = vmatmul.mubr.f32.gmra.mrb[0].mxu0 %v115
    %v183 = vpop.f32.mrb[0].mxu0
    %v184 = vadd.f32 %v101, %v183
    %v185 = vpop.f32.mrb[0].mxu0
    %v186 = vadd.f32 %v105, %v185
    %187 = vdwg.mxu0
    %188 = vmatprep.subr.mxu0 0.0
    %189 = vmatpush1.msra.mxu0 %v92
    %190 = vmatprep.subr.mxu0 0.0
    %191 = vmatpush1.msra.mxu0 %v95
    %192 = vmatprep.subr.mxu0 0.0
    %193 = vmatpush1.msra.mxu0 0.0
    %194 = vmatprep.subr.mxu0 0.0
    %195 = vmatpush1.msra.mxu0 0.0
    %196 = vmatprep.subr.mxu0 0.0
    %197 = vmatpush1.msra.mxu0 0.0
    %198 = vmatprep.subr.mxu0 0.0
    %199 = vmatpush1.msra.mxu0 0.0
    %200 = vmatprep.subr.mxu0 0.0
    %201 = vmatpush1.msra.mxu0 0.0
    %202 = vmatprep.subr.mxu0 0.0
    %203 = vmatpush1.msra.mxu0 0.0
    %204 = vmatprep.subr.mxu0 0.0
    %205 = vmatpush1.msra.mxu0 0.0
    %206 = vmatprep.subr.mxu0 0.0
    %207 = vmatpush1.msra.mxu0 0.0
    %208 = vmatprep.subr.mxu0 0.0
    %209 = vmatpush1.msra.mxu0 0.0
    %210 = vmatprep.subr.mxu0 0.0
    %211 = vmatpush1.msra.mxu0 0.0
    %212 = vmatprep.subr.mxu0 0.0
    %213 = vmatpush1.msra.mxu0 0.0
    %214 = vmatprep.subr.mxu0 0.0
    %215 = vmatpush1.msra.mxu0 0.0
    %216 = vmatprep.subr.mxu0 0.0
    %217 = vmatpush1.msra.mxu0 0.0
    %218 = vmatprep.subr.mxu0 0.0
    %219 = vmatpush1.msra.mxu0 0.0
    %220 = vmatprep.subr.mxu0 0.0
    %221 = vmatpush1.msra.mxu0 0.0
    %222 = vmatprep.subr.mxu0 0.0
    %223 = vmatpush1.msra.mxu0 0.0
    %224 = vmatprep.subr.mxu0 0.0
    %225 = vmatpush1.msra.mxu0 0.0
    %226 = vmatprep.subr.mxu0 0.0
    %227 = vmatpush1.msra.mxu0 0.0
    %228 = vmatprep.subr.mxu0 0.0
    %229 = vmatpush1.msra.mxu0 0.0
    %230 = vmatprep.subr.mxu0 0.0
    %231 = vmatpush1.msra.mxu0 0.0
    %232 = vmatprep.subr.mxu0 0.0
    %233 = vmatpush1.msra.mxu0 0.0
    %234 = vmatprep.subr.mxu0 0.0
    %235 = vmatpush1.msra.mxu0 0.0
    %236 = vmatprep.subr.mxu0 0.0
    %237 = vmatpush1.msra.mxu0 0.0
    %238 = vmatprep.subr.mxu0 0.0
    %239 = vmatpush1.msra.mxu0 0.0
    %240 = vmatprep.subr.mxu0 0.0
    %241 = vmatpush1.msra.mxu0 0.0
    %242 = vmatprep.subr.mxu0 0.0
    %243 = vmatpush1.msra.mxu0 0.0
    %244 = vmatprep.subr.mxu0 0.0
    %245 = vmatpush1.msra.mxu0 0.0
    %246 = vmatprep.subr.mxu0 0.0
    %247 = vmatpush1.msra.mxu0 0.0
    %248 = vmatprep.subr.mxu0 0.0
    %249 = vmatpush1.msra.mxu0 0.0
    %250 = vmatprep.subr.mxu0 0.0
    %251 = vmatpush1.msra.mxu0 0.0
    %252 = vmatprep.mubr.f32.mxu0 0.0
    %253 = vmatmul.mubr.f32.gmra.mrb[0].mxu0 %v115
    %v254 = vpop.f32.mrb[0].mxu0
    %v255 = vadd.f32 %v109, %v254
    %v256 = vpop.f32.mrb[0].mxu0
    %257 = vdwg.mxu0
    %v258 = vld [vmem:[#allocation8] sm:$0xff]
    %v259 = vld [vmem:[#allocation8 + $0x8] sm:$0xff]
    %v260 = vld [vmem:[#allocation8 + $0x10] sm:$0xff]
    %v261 = vld [vmem:[#allocation8 + $0x18] sm:$0xff]
    %v262 = vld [vmem:[#allocation8 + $0x20] sm:$0xff]
    %v263 = vld [vmem:[#allocation8 + $0x28] sm:$0xff]
    %v264 = vld [vmem:[#allocation8 + $0x30] sm:$0xff]
    %v265 = vld [vmem:[#allocation8 + $0x38] sm:$0xff]
    %v266 = vld [vmem:[#allocation8 + $0x40] sm:$0xff]
    %v267 = vld [vmem:[#allocation8 + $0x48] sm:$0xff]
    %v268 = vld [vmem:[#allocation8 + $0x50] sm:$0xff]
    %v269 = vld [vmem:[#allocation8 + $0x58] sm:$0xff]
    %v270 = vld [vmem:[#allocation8 + $0x60] sm:$0xff]
    %v271 = vld [vmem:[#allocation8 + $0x68] sm:$0xff]
    %v272 = vld [vmem:[#allocation8 + $0x70] sm:$0xff]
    %v273 = vld [vmem:[#allocation8 + $0x78] sm:$0xff]
    %v274 = vld [vmem:[#allocation8 + $0x80] sm:$0xff]
    %v275 = vld [vmem:[#allocation8 + $0x88] sm:$0xff]
    %v276 = vld [vmem:[#allocation8 + $0x90] sm:$0xff]
    %v277 = vld [vmem:[#allocation8 + $0x98] sm:$0xff]
    %v278 = vld [vmem:[#allocation8 + $0xa0] sm:$0xff]
    %v279 = vld [vmem:[#allocation8 + $0xa8] sm:$0xff]
    %v280 = vld [vmem:[#allocation8 + $0xb0] sm:$0xff]
    %v281 = vld [vmem:[#allocation8 + $0xb8] sm:$0xff]
    %v282 = vld [vmem:[#allocation8 + $0xc0] sm:$0xff]
    %v283 = vld [vmem:[#allocation8 + $0xc8] sm:$0xff]
    %v284 = vld [vmem:[#allocation8 + $0xd0] sm:$0xff]
    %v285 = vld [vmem:[#allocation8 + $0xd8] sm:$0xff]
    %v286 = vld [vmem:[#allocation8 + $0xe0] sm:$0xff]
    %v287 = vld [vmem:[#allocation8 + $0xe8] sm:$0xff]
    %v288 = vld [vmem:[#allocation8 + $0xf0] sm:$0xff]
    %v289 = vld [vmem:[#allocation8 + $0xf8] sm:$0xff]
    %290 = vmatprep.subr.mxu0 %v259
    %291 = vmatpush1.msra.mxu0 %v258
    %292 = vmatprep.subr.mxu0 %v261
    %293 = vmatpush1.msra.mxu0 %v260
    %294 = vmatprep.subr.mxu0 %v263
    %295 = vmatpush1.msra.mxu0 %v262
    %296 = vmatprep.subr.mxu0 %v265
    %297 = vmatpush1.msra.mxu0 %v264
    %298 = vmatprep.subr.mxu0 %v267
    %299 = vmatpush1.msra.mxu0 %v266
    %300 = vmatprep.subr.mxu0 %v269
    %301 = vmatpush1.msra.mxu0 %v268
    %302 = vmatprep.subr.mxu0 %v271
    %303 = vmatpush1.msra.mxu0 %v270
    %304 = vmatprep.subr.mxu0 %v273
    %305 = vmatpush1.msra.mxu0 %v272
    %306 = vmatprep.subr.mxu0 %v275
    %307 = vmatpush1.msra.mxu0 %v274
    %308 = vmatprep.subr.mxu0 %v277
    %309 = vmatpush1.msra.mxu0 %v276
    %310 = vmatprep.subr.mxu0 %v279
    %311 = vmatpush1.msra.mxu0 %v278
    %312 = vmatprep.subr.mxu0 %v281
    %313 = vmatpush1.msra.mxu0 %v280
    %314 = vmatprep.subr.mxu0 %v283
    %315 = vmatpush1.msra.mxu0 %v282
    %316 = vmatprep.subr.mxu0 %v285
    %317 = vmatpush1.msra.mxu0 %v284
    %318 = vmatprep.subr.mxu0 %v287
    %319 = vmatpush1.msra.mxu0 %v286
    %320 = vmatprep.subr.mxu0 %v289
    %321 = vmatpush1.msra.mxu0 %v288
    %322 = vmatprep.subr.mxu0 0.0
    %323 = vmatpush1.msra.mxu0 0.0
    %324 = vmatprep.subr.mxu0 0.0
    %325 = vmatpush1.msra.mxu0 0.0
    %326 = vmatprep.subr.mxu0 0.0
    %327 = vmatpush1.msra.mxu0 0.0
    %328 = vmatprep.subr.mxu0 0.0
    %329 = vmatpush1.msra.mxu0 0.0
    %330 = vmatprep.subr.mxu0 0.0
    %331 = vmatpush1.msra.mxu0 0.0
    %332 = vmatprep.subr.mxu0 0.0
    %333 = vmatpush1.msra.mxu0 0.0
    %334 = vmatprep.subr.mxu0 0.0
    %335 = vmatpush1.msra.mxu0 0.0
    %336 = vmatprep.subr.mxu0 0.0
    %337 = vmatpush1.msra.mxu0 0.0
    %338 = vmatprep.subr.mxu0 0.0
    %339 = vmatpush1.msra.mxu0 0.0
    %340 = vmatprep.subr.mxu0 0.0
    %341 = vmatpush1.msra.mxu0 0.0
    %342 = vmatprep.subr.mxu0 0.0
    %343 = vmatpush1.msra.mxu0 0.0
    %344 = vmatprep.subr.mxu0 0.0
    %345 = vmatpush1.msra.mxu0 0.0
    %346 = vmatprep.subr.mxu0 0.0
    %347 = vmatpush1.msra.mxu0 0.0
    %348 = vmatprep.subr.mxu0 0.0
    %349 = vmatpush1.msra.mxu0 0.0
    %350 = vmatprep.subr.mxu0 0.0
    %351 = vmatpush1.msra.mxu0 0.0
    %352 = vmatprep.subr.mxu0 0.0
    %353 = vmatpush1.msra.mxu0 0.0
    %354 = vmatprep.mubr.f32.mxu0 0.0
    %355 = vmatmul.mubr.f32.gmra.mrb[0].mxu0 %v88
    %v356 = vpop.f32.mrb[0].mxu0
    %v357 = vadd.f32 0.0, %v356
    %v358 = vpop.f32.mrb[0].mxu0
    %v359 = vadd.f32 0.0, %v358
    %360 = vdwg.mxu0
    %v361 = vadd.f32 %v184, %v357
    %v362 = vadd.f32 %v186, %v359
    %v363 = vxor.u32 %v361, 2147483648
    %v364 = vxor.u32 %v362, 2147483648
    %v365 = vmul.f32 %v363, 1.442695
    %v366 = vpow.pop %v365
    %v367 = vmul.f32 %v364, 1.442695
    %v368 = vpow.pop %v367
    %v369 = vadd.f32 %v366, 1.0
    %v370 = vadd.f32 %v368, 1.0
    %v371 = vrcp.pop %v369
    %v372 = vmul.f32 1.0, %v371
    %v373 = vrcp.pop %v370
    %v374 = vmul.f32 1.0, %v373
    %v375 = vmul.f32 %v374, %v88
    %v376 = vld [vmem:[#allocation10] sm:$0xff]
    %v377 = vld [vmem:[#allocation10 + $0x8] sm:$0xff]
    %v378 = vld [vmem:[#allocation10 + $0x10] sm:$0xff]
    %v379 = vld [vmem:[#allocation10 + $0x18] sm:$0xff]
    %v380 = vld [vmem:[#allocation10 + $0x20] sm:$0xff]
    %v381 = vld [vmem:[#allocation10 + $0x28] sm:$0xff]
    %v382 = vld [vmem:[#allocation10 + $0x30] sm:$0xff]
    %v383 = vld [vmem:[#allocation10 + $0x38] sm:$0xff]
    %v384 = vld [vmem:[#allocation10 + $0x40] sm:$0xff]
    %v385 = vld [vmem:[#allocation10 + $0x48] sm:$0xff]
    %v386 = vld [vmem:[#allocation10 + $0x50] sm:$0xff]
    %v387 = vld [vmem:[#allocation10 + $0x58] sm:$0xff]
    %v388 = vld [vmem:[#allocation10 + $0x60] sm:$0xff]
    %v389 = vld [vmem:[#allocation10 + $0x68] sm:$0xff]
    %v390 = vld [vmem:[#allocation10 + $0x70] sm:$0xff]
    %v391 = vld [vmem:[#allocation10 + $0x78] sm:$0xff]
    %392 = vmatprep.subr.mxu0 0.0
    %393 = vmatpush1.msra.mxu0 %v376
    %394 = vmatprep.subr.mxu0 0.0
    %395 = vmatpush1.msra.mxu0 %v377
    %396 = vmatprep.subr.mxu0 0.0
    %397 = vmatpush1.msra.mxu0 %v378
    %398 = vmatprep.subr.mxu0 0.0
    %399 = vmatpush1.msra.mxu0 %v379
    %400 = vmatprep.subr.mxu0 0.0
    %401 = vmatpush1.msra.mxu0 %v380
    %402 = vmatprep.subr.mxu0 0.0
    %403 = vmatpush1.msra.mxu0 %v381
    %404 = vmatprep.subr.mxu0 0.0
    %405 = vmatpush1.msra.mxu0 %v382
    %406 = vmatprep.subr.mxu0 0.0
    %407 = vmatpush1.msra.mxu0 %v383
    %408 = vmatprep.subr.mxu0 0.0
    %409 = vmatpush1.msra.mxu0 %v384
    %410 = vmatprep.subr.mxu0 0.0
    %411 = vmatpush1.msra.mxu0 %v385
    %412 = vmatprep.subr.mxu0 0.0
    %413 = vmatpush1.msra.mxu0 %v386
    %414 = vmatprep.subr.mxu0 0.0
    %415 = vmatpush1.msra.mxu0 %v387
    %416 = vmatprep.subr.mxu0 0.0
    %417 = vmatpush1.msra.mxu0 %v388
    %418 = vmatprep.subr.mxu0 0.0
    %419 = vmatpush1.msra.mxu0 %v389
    %420 = vmatprep.subr.mxu0 0.0
    %421 = vmatpush1.msra.mxu0 %v390
    %422 = vmatprep.subr.mxu0 0.0
    %423 = vmatpush1.msra.mxu0 %v391
    %424 = vmatprep.subr.mxu0 0.0
    %425 = vmatpush1.msra.mxu0 0.0
    %426 = vmatprep.subr.mxu0 0.0
    %427 = vmatpush1.msra.mxu0 0.0
    %428 = vmatprep.subr.mxu0 0.0
    %429 = vmatpush1.msra.mxu0 0.0
    %430 = vmatprep.subr.mxu0 0.0
    %431 = vmatpush1.msra.mxu0 0.0
    %432 = vmatprep.subr.mxu0 0.0
    %433 = vmatpush1.msra.mxu0 0.0
    %434 = vmatprep.subr.mxu0 0.0
    %435 = vmatpush1.msra.mxu0 0.0
    %436 = vmatprep.subr.mxu0 0.0
    %437 = vmatpush1.msra.mxu0 0.0
    %438 = vmatprep.subr.mxu0 0.0
    %439 = vmatpush1.msra.mxu0 0.0
    %440 = vmatprep.subr.mxu0 0.0
    %441 = vmatpush1.msra.mxu0 0.0
    %442 = vmatprep.subr.mxu0 0.0
    %443 = vmatpush1.msra.mxu0 0.0
    %444 = vmatprep.subr.mxu0 0.0
    %445 = vmatpush1.msra.mxu0 0.0
    %446 = vmatprep.subr.mxu0 0.0
    %447 = vmatpush1.msra.mxu0 0.0
    %448 = vmatprep.subr.mxu0 0.0
    %449 = vmatpush1.msra.mxu0 0.0
    %450 = vmatprep.subr.mxu0 0.0
    %451 = vmatpush1.msra.mxu0 0.0
    %452 = vmatprep.subr.mxu0 0.0
    %453 = vmatpush1.msra.mxu0 0.0
    %454 = vmatprep.subr.mxu0 0.0
    %455 = vmatpush1.msra.mxu0 0.0
    %456 = vmatprep.mubr.f32.mxu0 0.0
    %457 = vmatmul.mubr.f32.gmra.mrb[0].mxu0 %v375
    %v458 = vpop.f32.mrb[0].mxu0
    %v459 = vadd.f32 0.0, %v458
    %v460 = vpop.f32.mrb[0].mxu0
    %461 = vdwg.mxu0
    %v462 = vadd.f32 %v255, %v459
    %v463 = vtanh.pop %v462
    %v464 = vsub.f32 %v88, %v463
    %v465 = vmul.f32 %v372, %v464
    %v466 = vadd.f32 %v463, %v465
    %467 = vst [vmem:[#allocation11] sm:$0xff] %v466
    // Predicated region
    $region46: #{tpu_custom_call.1} parent=1 // pred_check
      _
    $region47: #{tpu_custom_call.1} parent=1 // pred_check_branch
      %469 = sbr.rel (0) target = $region49
    $region48: #{tpu_custom_call.1} parent=1 // pred_region
      %s471 = ssub.s32 128, 128
      %472 = vsyncadd [#allocation4], %s471
      %s474 = sshll.u32 [#allocation11], 4
      %s475 = int_to_ptr.vmem [resolvable:$true] %s474
      %477 = dma.vmem_to_hbm [thread:$0]  %s475, 128, %s6, [#allocation4]
    $region49: #{tpu_custom_call.1} parent=1 // pred_fallthru
      _
    // Predicated region
    $region50: #{tpu_custom_call.1} parent=1 // pred_check
      _
    $region51: #{tpu_custom_call.1} parent=1 // pred_check_branch
      %479 = sbr.rel (0) target = $region53
    $region52: #{tpu_custom_call.1} parent=1 // pred_region
      %480 = dma.done [#allocation4], 128
    $region53: #{tpu_custom_call.1} parent=1 // pred_fallthru
      _
    %481 = vsyncpa [#allocation3], 1
    %482 = vsyncpa [#allocation6], 1
    %483 = vsyncpa [#allocation9], 1
    %484 = vsyncpa [#allocation4], 1

</llo_original>
